<compile_context>
chip_gen: v7x
topology: tpu7x:2x2x1
jax: 0.10.0
libtpu: 0.0.40
codegen_flags: <defaults>
</compile_context>

<pallas_src>
import functools
import math

import jax
import jax.numpy as jnp
from jax.experimental import pallas as pl
from jax.experimental.pallas import tpu as pltpu


_MAX_BLOCK_BYTES = 4 << 20     # ~4 MiB per input block (per buffer)
_VMEM_LIMIT_BYTES = 48 << 20   # below v7x 64 MiB physical; plenty on v5e/v6e


def _wrmse_kernel(o_ref, t_ref, w_ref, part_ref, acc_ref, *, fold):
    """Accumulate weighted squared error; write per-row-block partial sums."""
    j = pl.program_id(1)

    @pl.when(j == 0)
    def _():
        acc_ref[...] = jnp.zeros_like(acc_ref)

    o = o_ref[...].astype(jnp.float32)
    t = t_ref[...].astype(jnp.float32)
    w = w_ref[...].astype(jnp.float32)   # small slab; broadcasts over the block
    d = o - t
    # Hot loop: elementwise VPU work + leading-axis fold (pure VALU, no XLU).
    acc_ref[...] += fold(d * d * w)

    @pl.when(j == pl.num_programs(1) - 1)
    def _():
        # One cross-lane/sublane reduction per grid row, in the epilogue only.
        s = jnp.sum(acc_ref[...])
        part_ref[...] = jnp.broadcast_to(s, part_ref.shape)


def _divisors(n):
    ds = set()
    i = 1
    while i * i <= n:
        if n % i == 0:
            ds.add(i)
            ds.add(n // i)
        i += 1
    return sorted(ds)


def _sublane_pack(itemsize):
    # f32 -> 8 sublanes, bf16 -> 16, int8/fp8 -> 32.
    return 8 * max(1, 4 // itemsize)


def _plan_flat(batch, spatial, itemsize):
    """Tile plan for the (batch, H*W) layout (requires spatial % 128 == 0)."""
    max_elems = max(1024, _MAX_BLOCK_BYTES // itemsize)
    pack = _sublane_pack(itemsize)
    if batch % pack == 0:
        b_gran = pack
    elif batch % 8 == 0:
        b_gran = 8
    else:
        b_gran = batch                      # full-extent fallback (always legal)

    # Prefer wide tiles: largest 128-multiple divisor of spatial first.
    cap_s = max(128, max_elems // b_gran)
    tile_s = 128
    for d in reversed(_divisors(spatial)):
        if d % 128 == 0 and d <= cap_s:
            tile_s = d
            break

    # Then grow the row tile under the joint element budget.
    tile_b = b_gran
    for d in _divisors(batch):
        if d % b_gran == 0 and d * tile_s <= max_elems and d > tile_b:
            tile_b = d
    return tile_b, tile_s


def _plan_3d(batch, H, W, itemsize):
    """Tile plan for the (batch, H, W) layout (non-128-divisible spatial)."""
    max_elems = max(1024, _MAX_BLOCK_BYTES // itemsize)
    pack = _sublane_pack(itemsize)
    cap_h = max(1, max_elems // max(1, W))

    tile_h = None
    for align in (pack, 8):
        for d in reversed(_divisors(H)):
            if d % align == 0 and d <= cap_h:
                tile_h = d
                break
        if tile_h is not None:
            break
    if tile_h is None:
        # No 8-aligned divisor of H (e.g. ERA5 H=721): take full H (legal block).
        tile_h = H
    # TODO(synk): if H has no 8-aligned divisor AND H*W is enormous, this block
    # can exceed the VMEM budget; a masked remainder tile would be needed.

    tile_b = 1
    for d in _divisors(batch):
        if d * tile_h * W <= max_elems and d > tile_b:
            tile_b = d
    return tile_b, tile_h


def wrmse(output, target, weights):
    """Weighted MSE: mean((output - target)**2 * weights). Returns f32 scalar."""
    assert output.shape == target.shape
    assert output.ndim >= 2, "expected at least 2D input"
    shape = output.shape
    n_total = int(math.prod(shape))
    batch = int(math.prod(shape[:-2]))
    H, W = shape[-2], shape[-1]
    spatial = H * W
    itemsize = jnp.dtype(output.dtype).itemsize

    # Normalize weight rank; detect the common case (weight varies only over
    # the last two / spatial dims), which keeps the weight a tiny reused slab.
    w = jnp.asarray(weights)
    if w.ndim < output.ndim:
        w = w.reshape((1,) * (output.ndim - w.ndim) + w.shape)
    w_spatial_only = all(d == 1 for d in w.shape[:-2])

    if spatial % 128 == 0:
        # ---- Flat (batch, H*W) layout: 128-aligned, lane-contiguous DMA rows.
        tile_b, tile_s = _plan_flat(batch, spatial, itemsize)
        o2 = output.reshape(batch, spatial)
        t2 = target.reshape(batch, spatial)
        grid = (batch // tile_b, spatial // tile_s)
        data_spec = pl.BlockSpec((tile_b, tile_s), lambda i, j: (i, j))

        if w_spatial_only:
            w2 = jnp.broadcast_to(w.reshape(w.shape[-2:]), (H, W)).reshape(1, spatial)
            w_spec = pl.BlockSpec((1, tile_s), lambda i, j: (0, j))
        else:
            # Rare: weight varies over batch/channel dims -> stream it too.
            w2 = jnp.broadcast_to(w, shape).reshape(batch, spatial)
            w_spec = pl.BlockSpec((tile_b, tile_s), lambda i, j: (i, j))

        if tile_b % 8 == 0:
            acc_shape = (8, tile_s)
            g = tile_b // 8
            if g > 1:
                fold = lambda p: p.reshape(g, 8, tile_s).sum(axis=0)
            else:
                fold = lambda p: p
        else:
            acc_shape = (tile_b, tile_s)
            fold = lambda p: p
    else:
        # ---- (batch, H, W) layout: full-extent last dim keeps blocks bounded
        #      for non-128-divisible spatial sizes (e.g. ERA5 721x1440).
        tile_b, tile_h = _plan_3d(batch, H, W, itemsize)
        o2 = output.reshape(batch, H, W)
        t2 = target.reshape(batch, H, W)
        grid = (batch // tile_b, H // tile_h)
        data_spec = pl.BlockSpec((tile_b, tile_h, W), lambda i, j: (i, j, 0))

        if w_spatial_only:
            w2 = jnp.broadcast_to(w.reshape(w.shape[-2:]), (H, W)).reshape(1, H, W)
            w_spec = pl.BlockSpec((1, tile_h, W), lambda i, j: (0, j, 0))
        else:
            w2 = jnp.broadcast_to(w, shape).reshape(batch, H, W)
            w_spec = pl.BlockSpec((tile_b, tile_h, W), lambda i, j: (i, j, 0))

        if tile_h % 8 == 0:
            rows = tile_b * tile_h
            acc_shape = (8, W)
            g = rows // 8
            if g > 1:
                fold = lambda p: p.reshape(g, 8, W).sum(axis=0)
            else:
                fold = lambda p: p.reshape(8, W)
        else:
            acc_shape = (tile_h, W)
            if tile_b > 1:
                fold = lambda p: p.sum(axis=0)
            else:
                fold = lambda p: p.reshape(tile_h, W)

    kernel = functools.partial(_wrmse_kernel, fold=fold)

    # Per-grid-row partial sums as lane-dense (1, 8, 128) blocks so grid axis 0
    # can be "parallel" (v7x: each TC writes back only the blocks it owns).
    partials = pl.pallas_call(
        kernel,
        out_shape=jax.ShapeDtypeStruct((grid[0], 8, 128), jnp.float32),
        grid_spec=pltpu.PrefetchScalarGridSpec(
            num_scalar_prefetch=0,
            grid=grid,
            in_specs=[data_spec, data_spec, w_spec],
            out_specs=pl.BlockSpec((1, 8, 128), lambda i, j: (i, 0, 0)),
            scratch_shapes=[pltpu.VMEM(acc_shape, jnp.float32)],
        ),
        compiler_params=pltpu.CompilerParams(
            dimension_semantics=("parallel", "arbitrary"),
            vmem_limit_bytes=_VMEM_LIMIT_BYTES),
    )(o2, t2, w2)

    return jnp.sum(partials[:, 0, 0]) / jnp.float32(n_total)


if __name__ == "__main__":
    key = jax.random.PRNGKey(0)
    k1, k2, k3 = jax.random.split(key, 3)

    # Primary check: canonical NCHW with a per-latitude weight (1, 1, H, 1).
    N, C, H, W = 2, 4, 16, 16
    output = jax.random.normal(k1, (N, C, H, W), dtype=jnp.float32)
    target = jax.random.normal(k2, (N, C, H, W), dtype=jnp.float32)
    weights = jax.random.uniform(k3, (1, 1, H, 1), dtype=jnp.float32) + 0.5

    loss = wrmse(output, target, weights)
    jax.block_until_ready(loss)
    ref = jnp.mean(((output - target) ** 2) * weights)
    assert jnp.allclose(loss, ref, rtol=1e-5, atol=1e-6), (loss, ref)

    # Secondary check: non-128-divisible spatial (exercises the (B, H, W) path).
    N2, C2, H2, W2 = 2, 3, 10, 12
    o2 = jax.random.normal(k1, (N2, C2, H2, W2), dtype=jnp.float32)
    t2 = jax.random.normal(k2, (N2, C2, H2, W2), dtype=jnp.float32)
    w2 = jax.random.uniform(k3, (1, 1, H2, 1), dtype=jnp.float32) + 0.5
    loss2 = wrmse(o2, t2, w2)
    jax.block_until_ready(loss2)
    ref2 = jnp.mean(((o2 - t2) ** 2) * w2)
    assert jnp.allclose(loss2, ref2, rtol=1e-5, atol=1e-6), (loss2, ref2)

    print("KERNEL_OK")
</pallas_src>

<mosaic_0001>
module attributes {stable_mosaic.version = 11 : i64} {
  func.func @_wrmse_kernel(%arg0: i32, %arg1: i32, %arg2: memref<8x256xf32, #tpu.memory_space<vmem>>, %arg3: memref<8x256xf32, #tpu.memory_space<vmem>>, %arg4: memref<1x256xf32, #tpu.memory_space<vmem>>, %arg5: memref<1x8x128xf32, #tpu.memory_space<vmem>>, %arg6: memref<8x256xf32, #tpu.memory_space<vmem>>) attributes {dimension_semantics = [#tpu.dimension_semantics<parallel>, #tpu.dimension_semantics<arbitrary>], iteration_bounds = array<i64: 1, 1>, scalar_prefetch = 0 : i64, scratch_operands = 1 : i64, tpu.core_type = #tpu.core_type<tc>, window_params = [{transform_indices = @transform_0, window_bounds = array<i64: 8, 256>}, {transform_indices = @transform_1, window_bounds = array<i64: 8, 256>}, {transform_indices = @transform_2, window_bounds = array<i64: 1, 256>}, {transform_indices = @transform_3, window_bounds = array<i64: 1, 8, 128>}]} {
    %c0_i32 = arith.constant 0 : i32
    %0 = arith.cmpi eq, %arg1, %c0_i32 : i32
    %1 = arith.extui %0 : i1 to i32
    %c0_i32_0 = arith.constant 0 : i32
    %2 = arith.cmpi ne, %1, %c0_i32_0 : i32
    scf.if %2 {
      %cst = arith.constant 0.000000e+00 : f32
      %16 = vector.broadcast %cst : f32 to vector<8x256xf32>
      %c0_12 = arith.constant 0 : index
      %c0_13 = arith.constant 0 : index
      %17 = vector.load %arg6[%c0_12, %c0_13] : memref<8x256xf32, #tpu.memory_space<vmem>>, vector<8x256xf32>
      tpu.vector_store %arg6[%c0_12, %c0_13], %16 {strides = array<i32>} : memref<8x256xf32, #tpu.memory_space<vmem>>, vector<8x256xf32>,
    } else {
    }
    %c0 = arith.constant 0 : index
    %c0_1 = arith.constant 0 : index
    %3 = vector.load %arg2[%c0, %c0_1] : memref<8x256xf32, #tpu.memory_space<vmem>>, vector<8x256xf32>
    %c0_2 = arith.constant 0 : index
    %c0_3 = arith.constant 0 : index
    %4 = vector.load %arg3[%c0_2, %c0_3] : memref<8x256xf32, #tpu.memory_space<vmem>>, vector<8x256xf32>
    %c0_4 = arith.constant 0 : index
    %c0_5 = arith.constant 0 : index
    %5 = vector.load %arg4[%c0_4, %c0_5] : memref<1x256xf32, #tpu.memory_space<vmem>>, vector<1x256xf32>
    %6 = arith.subf %3, %4 : vector<8x256xf32>
    %c0_6 = arith.constant 0 : index
    %c0_7 = arith.constant 0 : index
    %7 = vector.load %arg6[%c0_6, %c0_7] : memref<8x256xf32, #tpu.memory_space<vmem>>, vector<8x256xf32>
    %8 = arith.mulf %6, %6 : vector<8x256xf32>
    %9 = vector.broadcast %5 : vector<1x256xf32> to vector<8x256xf32>
    %10 = arith.mulf %8, %9 : vector<8x256xf32>
    %11 = arith.addf %7, %10 : vector<8x256xf32>
    %c0_8 = arith.constant 0 : index
    %c0_9 = arith.constant 0 : index
    %12 = vector.load %arg6[%c0_8, %c0_9] : memref<8x256xf32, #tpu.memory_space<vmem>>, vector<8x256xf32>
    tpu.vector_store %arg6[%c0_8, %c0_9], %11 {strides = array<i32>} : memref<8x256xf32, #tpu.memory_space<vmem>>, vector<8x256xf32>,
    %c0_i32_10 = arith.constant 0 : i32
    %13 = arith.cmpi eq, %arg1, %c0_i32_10 : i32
    %14 = arith.extui %13 : i1 to i32
    %c0_i32_11 = arith.constant 0 : i32
    %15 = arith.cmpi ne, %14, %c0_i32_11 : i32
    scf.if %15 {
      %c0_12 = arith.constant 0 : index
      %c0_13 = arith.constant 0 : index
      %16 = vector.load %arg6[%c0_12, %c0_13] : memref<8x256xf32, #tpu.memory_space<vmem>>, vector<8x256xf32>
      %17 = vector.shape_cast %16 : vector<8x256xf32> to vector<1x8x256xf32>
      %cst = arith.constant dense<0.000000e+00> : vector<1xf32>
      %18 = vector.multi_reduction <add>, %17, %cst [1, 2] : vector<1x8x256xf32> to vector<1xf32>
      %19 = vector.shape_cast %18 : vector<1xf32> to vector<1x1x1xf32>
      %20 = vector.extract %19[0, 0, 0] : f32 from vector<1x1x1xf32>
      %21 = vector.broadcast %20 : f32 to vector<1x8x128xf32>
      %c0_14 = arith.constant 0 : index
      %c0_15 = arith.constant 0 : index
      %c0_16 = arith.constant 0 : index
      %22 = vector.load %arg5[%c0_14, %c0_15, %c0_16] : memref<1x8x128xf32, #tpu.memory_space<vmem>>, vector<1x8x128xf32>
      tpu.vector_store %arg5[%c0_14, %c0_15, %c0_16], %21 {strides = array<i32>} : memref<1x8x128xf32, #tpu.memory_space<vmem>>, vector<1x8x128xf32>,
    } else {
    }
    return
  }
  func.func @transform_0(%arg0: i32, %arg1: i32) -> (i32, i32) {
    %c0_i32 = arith.constant 0 : i32
    return %arg0, %arg1 : i32, i32
  }
  func.func @transform_1(%arg0: i32, %arg1: i32) -> (i32, i32) {
    %c0_i32 = arith.constant 0 : i32
    return %arg0, %arg1 : i32, i32
  }
  func.func @transform_2(%arg0: i32, %arg1: i32) -> (i32, i32) {
    %c0_i32 = arith.constant 0 : i32
    %c0_i32_0 = arith.constant 0 : i32
    return %c0_i32, %arg1 : i32, i32
  }
  func.func @transform_3(%arg0: i32, %arg1: i32) -> (i32, i32, i32) {
    %c0_i32 = arith.constant 0 : i32
    %c0_i32_0 = arith.constant 0 : i32
    %c0_i32_1 = arith.constant 0 : i32
    return %arg0, %c0_i32, %c0_i32_0 : i32, i32, i32
  }
}

</mosaic_0001>

<llo_original>
// kernel: tpu_custom_call.1
$region0: #{tpu_custom_call.1}
  #allocation0 [shape = 'u32[]', space=smem, size = 0x4, offset = 0x4, fixed_abs, tag = 'smem constant byte address 0x4 - core index']
  #allocation1 [shape = 'u32[144,128]{1,0:T(1,128)}', space=vmem, size = 0x12000, scoped, tag = 'internal scratch']
  #allocation2 [shape = 'f32[8,256]{1,0:T(8,128)}', space=vmem, size = 0x2000, scoped, tag = 'scratch operand']
  %s0 = inlined_call_operand.hbm [shape: f32[8,256], index: 0, kind: input, shape index: {}]
  %s1 = inlined_call_operand.hbm [shape: f32[8,256], index: 1, kind: input, shape index: {}]
  %s2 = inlined_call_operand.vmem [shape: f32[1,256], index: 2, kind: input, shape index: {}]
  %s3 = inlined_call_operand.hbm [shape: f32[1,8,128], index: 3, kind: output, shape index: {}]
  %s4 = sld [smem:[#allocation0]]
  $region38: #{tpu_custom_call.1} parent=0
    _
  %s6 = ssub.s32 1, %s4
  %s7 = scalar_select 0, %s6, %s4
  $region1: #{tpu_custom_call.1} parent=0
    #allocation3 [shape = 'u8[8192]{0}', space=vmem, size = 0x2000, scoped, tag = 'input window, operand 0, single buffered']
    #allocation4 [shape = 's32[1]{0}', space=sflag, size = 0x4, scoped, tag = 'scoped memory for tpu_custom_call.1']
    #allocation5 [shape = 's32[1]{0}', space=sflag, size = 0x4, scoped, tag = 'scoped memory for tpu_custom_call.1']
    #allocation6 [shape = 'u8[8192]{0}', space=vmem, size = 0x2000, scoped, tag = 'input window, operand 1, single buffered']
    #allocation7 [shape = 's32[1]{0}', space=sflag, size = 0x4, scoped, tag = 'scoped memory for tpu_custom_call.1']
    #allocation8 [shape = 'u8[4096]{0}', space=vmem, size = 0x1000, scoped, tag = 'output window, operand 0, single buffered']
    %8 = vsyncpa [#allocation4], 0
    %9 = vsyncpa [#allocation7], 0
    %10 = vsyncpa [#allocation5], 0
    // Predicated region
    $region2: #{tpu_custom_call.1} parent=1 // pred_check
      _
    $region3: #{tpu_custom_call.1} parent=1 // pred_check_branch
      %12 = sbr.rel (0) target = $region5
    $region4: #{tpu_custom_call.1} parent=1 // pred_region
      %s14 = ssub.s32 256, 256
      %15 = vsyncadd [#allocation4], %s14
      %s17 = sshll.u32 [#allocation3], 4
      %s18 = int_to_ptr.vmem [resolvable:$true] %s17
      %20 = dma.hbm_to_vmem [thread:$0]  %s0, 256, %s18, [#allocation4]
    $region5: #{tpu_custom_call.1} parent=1 // pred_fallthru
      _
    // Predicated region
    $region6: #{tpu_custom_call.1} parent=1 // pred_check
      _
    $region7: #{tpu_custom_call.1} parent=1 // pred_check_branch
      %22 = sbr.rel (0) target = $region9
    $region8: #{tpu_custom_call.1} parent=1 // pred_region
      %s24 = ssub.s32 256, 256
      %25 = vsyncadd [#allocation7], %s24
      %s27 = sshll.u32 [#allocation6], 4
      %s28 = int_to_ptr.vmem [resolvable:$true] %s27
      %30 = dma.hbm_to_vmem [thread:$0]  %s1, 256, %s28, [#allocation7]
    $region9: #{tpu_custom_call.1} parent=1 // pred_fallthru
      _
    // Predicated region
    $region10: #{tpu_custom_call.1} parent=1 // pred_check
      _
    $region11: #{tpu_custom_call.1} parent=1 // pred_check_branch
      %32 = sbr.rel (0) target = $region13
    $region12: #{tpu_custom_call.1} parent=1 // pred_region
      _
    $region13: #{tpu_custom_call.1} parent=1 // pred_fallthru
      _
    // Predicated region
    $region14: #{tpu_custom_call.1} parent=1 // pred_check
      _
    $region15: #{tpu_custom_call.1} parent=1 // pred_check_branch
      %34 = sbr.rel (0) target = $region17
    $region16: #{tpu_custom_call.1} parent=1 // pred_region
      %35 = dma.done [#allocation4], 256
    $region17: #{tpu_custom_call.1} parent=1 // pred_fallthru
      _
    // Predicated region
    $region18: #{tpu_custom_call.1} parent=1 // pred_check
      _
    $region19: #{tpu_custom_call.1} parent=1 // pred_check_branch
      %37 = sbr.rel (0) target = $region21
    $region20: #{tpu_custom_call.1} parent=1 // pred_region
      %38 = dma.done [#allocation7], 256
    $region21: #{tpu_custom_call.1} parent=1 // pred_fallthru
      _
    %p39 = scmp.eq.s32.totalorder 0, 0
    // Predicated region
    $region22: #{tpu_custom_call.1} parent=1 // pred_check
      %p40 = pneg %p39
    $region23: #{tpu_custom_call.1} parent=1 // pred_check_branch
      %42 = sbr.rel (%p40) target = $region25
    $region24: #{tpu_custom_call.1} parent=1 // pred_region
      %43 = vst [vmem:[#allocation2] sm:$0xff] 0.0
      %44 = vst [vmem:[#allocation2 + $0x8] sm:$0xff] 0.0
    $region25: #{tpu_custom_call.1} parent=1 // pred_fallthru
      _
    %v45 = vld [vmem:[#allocation3] sm:$0xff]
    %v46 = vld [vmem:[#allocation3 + $0x8] sm:$0xff]
    %v47 = vld [vmem:[#allocation6] sm:$0xff]
    %v48 = vld [vmem:[#allocation6 + $0x8] sm:$0xff]
    %v49 = vld [vmem:[%s2] sm:$0x3]
    %v50 = vsub.f32 %v45, %v47
    %v51 = vsub.f32 %v46, %v48
    %v52 = vld [vmem:[#allocation2] sm:$0xff]
    %v53 = vld [vmem:[#allocation2 + $0x8] sm:$0xff]
    %v54 = vmul.f32 %v50, %v50
    %v55 = vmul.f32 %v51, %v51
    %v57 = vlaneseq
    %v58 = vshrl.u32 %v57, 7
    %v59 = vsub.s32 0, %v58
    %v60 = vrot.slane %v49, %v59
    %v61 = vlaneseq
    %v62 = vshrl.u32 %v61, 7
    %v63 = vsub.s32 1, %v62
    %v64 = vrot.slane %v49, %v63
    %v67 = vmul.f32 %v54, %v60
    %v68 = vmul.f32 %v55, %v64
    %v69 = vadd.f32 %v52, %v67
    %v70 = vadd.f32 %v53, %v68
    %71 = vst [vmem:[#allocation2] sm:$0xff] %v69
    %72 = vst [vmem:[#allocation2 + $0x8] sm:$0xff] %v70
    // Predicated region
    $region26: #{tpu_custom_call.1} parent=1 // pred_check
      %p73 = pneg %p39
    $region27: #{tpu_custom_call.1} parent=1 // pred_check_branch
      %75 = sbr.rel (%p73) target = $region29
    $region28: #{tpu_custom_call.1} parent=1 // pred_region
      %v76 = vld [vmem:[#allocation2] sm:$0xff]
      %v77 = vld [vmem:[#allocation2 + $0x8] sm:$0xff]
      %v78 = vadd.f32 %v76, %v77
      %79 = vadd.xlane.f32.xlu0 %v78
      %v80 = vpop.xlane.xlu0 %79
      %v81 = vrot.slane %v80, 4
      %v82 = vadd.f32 %v80, %v81
      %v83 = vrot.slane %v82, 2
      %v84 = vadd.f32 %v82, %v83
      %v85 = vrot.slane %v84, 1
      %v86 = vadd.f32 %v84, %v85
      %s87 = vtos %v86
      %v88 = vstv %s87
      %89 = vst [vmem:[#allocation8] sm:$0xff] %v88
    $region29: #{tpu_custom_call.1} parent=1 // pred_fallthru
      _
    // Predicated region
    $region30: #{tpu_custom_call.1} parent=1 // pred_check
      _
    $region31: #{tpu_custom_call.1} parent=1 // pred_check_branch
      %91 = sbr.rel (0) target = $region33
    $region32: #{tpu_custom_call.1} parent=1 // pred_region
      %s93 = ssub.s32 128, 128
      %94 = vsyncadd [#allocation5], %s93
      %s96 = sshll.u32 [#allocation8], 4
      %s97 = int_to_ptr.vmem [resolvable:$true] %s96
      %99 = dma.vmem_to_hbm [thread:$0]  %s97, 128, %s3, [#allocation5]
    $region33: #{tpu_custom_call.1} parent=1 // pred_fallthru
      _
    // Predicated region
    $region34: #{tpu_custom_call.1} parent=1 // pred_check
      _
    $region35: #{tpu_custom_call.1} parent=1 // pred_check_branch
      %101 = sbr.rel (0) target = $region37
    $region36: #{tpu_custom_call.1} parent=1 // pred_region
      %102 = dma.done [#allocation5], 128
    $region37: #{tpu_custom_call.1} parent=1 // pred_fallthru
      _
    %103 = vsyncpa [#allocation4], 1
    %104 = vsyncpa [#allocation7], 1
    %105 = vsyncpa [#allocation5], 1

</llo_original>
